<compile_context>
chip_gen: v6e
topology: v6e:2x2x1
jax: 0.10.0
libtpu: 0.0.40
codegen_flags: <defaults>
</compile_context>

<pallas_src>
import functools

import jax
import jax.numpy as jnp
from jax import lax
from jax.experimental import pallas as pl
from jax.experimental.pallas import tpu as pltpu


def _sublane_multiple(dtype) -> int:
    """Minimum sublane tiling for a dtype: 8 (f32), 16 (bf16), 32 (int8)."""
    return max(8, 32 // jnp.dtype(dtype).itemsize)


def _vmem_estimate_bytes(tb, s_pad, H, key_bytes, out_bytes):
    """Conservative per-step VMEM: double-buffered streams + resident weights
    + in-kernel f32 intermediates (uk / tanh are the real VMEM hog)."""
    rows = tb * s_pad
    stream = 2 * (rows * H * key_bytes          # keys tile (double buffered)
                  + tb * H * 4                  # wq tile (f32)
                  + tb * H * out_bytes          # context tile
                  + tb * s_pad * out_bytes)     # weights tile
    resident = 2 * (H * H * key_bytes + H * 4)  # Ua + Va
    interm = 2 * rows * H * 4 + 2 * tb * rows * 4   # uk/t (f32) + block-diag W
    return stream + resident + interm


def _choose_block_b(B, s_pad, H, key_bytes, out_bytes, tb_align,
                    max_rows=2048, vmem_budget_bytes=48 * 1024 * 1024):
    """Pick TB: (a) (TB, .) blocks sublane-aligned, (b) ~1-2K MXU rows/step,
    (c) VMEM estimate under a v7x-safe (64 MiB physical) budget, (d) prefer
    >= 2 grid steps so both v7x TensorCores get work."""
    aligned = [tb for tb in range(1, B + 1)
               if B % tb == 0 and (tb == B or tb % tb_align == 0)]
    fitting = [tb for tb in aligned
               if tb * s_pad <= max_rows
               and _vmem_estimate_bytes(tb, s_pad, H, key_bytes, out_bytes)
               <= vmem_budget_bytes]
    cands = fitting if fitting else [min(aligned)]
    multi_step = [tb for tb in cands if tb <= B // 2]   # >= 2 grid steps (v7x)
    return max(multi_step) if multi_step else max(cands)


def _bahdanau_kernel(wq_ref, k_ref, ua_ref, va_ref, ctx_ref, w_ref, *,
                     block_b, seq_len, seq_pad, tanh_dtype):
    # wq_ref : (TB, H)        f32   query @ Wa + (ba + bu)  (biases pre-folded)
    # k_ref  : (TB*SP, H)     keys, flattened (SP = padded S, SP % sublane == 0)
    # ua_ref : (H, H)         pre-transposed (in, out), resident across steps
    # va_ref : (1, H)         f32   Va weight as a row
    # ctx_ref: (TB, H)        w_ref: (TB, SP)
    TB, S, SP = block_b, seq_len, seq_pad
    H = k_ref.shape[-1]

    keys = k_ref[...]                                        # (TB*SP, H)

    # Ua(keys): one tall MXU matmul over the whole batch block (f32 accum).
    uk = jnp.dot(keys, ua_ref[...],
                 preferred_element_type=jnp.float32)         # (TB*SP, H) f32

    # + Wa(query) (+ fused biases); SP % 8 == 0 => the reshape is layout-free.
    x = uk.reshape(TB, SP, H) + wq_ref[...][:, None, :]      # (TB, SP, H) f32
    # tanh on the EUP; bf16 packing doubles its throughput on v6e/v7x
    # (pass tanh_dtype=f32 on v5e, which has no bf16 EUP/VPU).
    t = jnp.tanh(x.astype(tanh_dtype)).astype(jnp.float32)

    # scores = Va . t : VPU multiply + XLU lane reduce — no M=1 MXU matmuls,
    # and the result lands directly in (TB, SP) row (lane-major) layout.
    scores = jnp.sum(t * va_ref[...], axis=-1)               # (TB, SP) f32
    # (The Va bias is a constant shift of every score -> cancels in softmax.)
    if SP != S:
        lane = lax.broadcasted_iota(jnp.int32, (TB, SP), 1)
        scores = jnp.where(lane < S, scores, -jnp.inf)       # mask padded keys

    # Softmax over the key axis (lanes). Exact reciprocal so the returned
    # attention weights sum to 1.
    m = jnp.max(scores, axis=-1, keepdims=True)
    e = jnp.exp(scores - m)
    weights = e / jnp.sum(e, axis=-1, keepdims=True)         # (TB, SP) f32

    # context: ONE block-diagonal MXU matmul instead of TB batched M=1 matmuls.
    #   w_bd[b, b'*SP + s] = weights[b, s] if b' == b else 0
    # built with a lane concat (stays lane-major) + iota mask on the VPU.
    w_tiled = jnp.concatenate([weights] * TB, axis=1)        # (TB, TB*SP)
    col = lax.broadcasted_iota(jnp.int32, (TB, TB * SP), 1)
    row_start = lax.broadcasted_iota(jnp.int32, (TB, TB * SP), 0) * SP
    w_bd = jnp.where((col >= row_start) & (col < row_start + SP),
                     w_tiled, 0.0).astype(keys.dtype)
    ctx = jnp.dot(w_bd, keys, preferred_element_type=jnp.float32)   # (TB, H)

    ctx_ref[...] = ctx.astype(ctx_ref.dtype)
    w_ref[...] = weights.astype(w_ref.dtype)


def bahdanau_attention(query, keys, wa, ba, ua, bu, va, bv, *,
                       block_b=None, compute_dtype=None, tanh_dtype=None):
    """query (B,1,H), keys (B,S,H); wa/ua pre-transposed to (in, out).

    compute_dtype: dtype for keys/Ua inside the kernel (jnp.bfloat16 halves
      keys DMA traffic; MXU still accumulates in f32). Defaults to keys.dtype.
    tanh_dtype: dtype of the in-kernel tanh. Defaults to bf16 when
      compute_dtype is bf16 (good on v6e/v7x); pass jnp.float32 on v5e.
    """
    del bv  # constant shift of every score; cancels exactly in the softmax.
    B, _, H = query.shape
    S = keys.shape[1]
    out_dtype = query.dtype

    if compute_dtype is None:
        compute_dtype = keys.dtype
    if tanh_dtype is None:
        tanh_dtype = (jnp.bfloat16 if jnp.dtype(compute_dtype) == jnp.bfloat16
                      else jnp.float32)

    # Hoist the query projection (an M=1 matmul — terrible MXU shape in-kernel)
    # to one small XLA matmul, folding both linear biases (they broadcast over
    # S identically). Kept in f32: only B*H elements.
    wq = (jnp.dot(query.reshape(B, H).astype(jnp.float32),
                  wa.astype(jnp.float32), precision=lax.Precision.HIGHEST)
          + (ba + bu).astype(jnp.float32))                        # (B, H)
    va2 = va.reshape(1, H).astype(jnp.float32)

    # Pad S to the dtype's sublane multiple so the flattened keys tile and the
    # in-kernel reshapes are layout-free. (H is left as-is: blocks use the full
    # H extent, which satisfies the lane constraint; callers should use
    # H % 128 == 0 for lane-dense tiles.)
    sub_k = _sublane_multiple(compute_dtype)
    S_pad = -(-S // sub_k) * sub_k
    keys_c = keys.astype(compute_dtype)
    if S_pad != S:
        keys_c = jnp.pad(keys_c, ((0, 0), (0, S_pad - S), (0, 0)))
    keys_flat = keys_c.reshape(B * S_pad, H)                      # dense 2D
    ua_c = ua.astype(compute_dtype)

    key_bytes = jnp.dtype(compute_dtype).itemsize
    out_bytes = jnp.dtype(out_dtype).itemsize
    tb_align = max(8, _sublane_multiple(out_dtype))
    if block_b is None:
        TB = _choose_block_b(B, S_pad, H, key_bytes, out_bytes, tb_align)
    else:
        TB = block_b
        assert B % TB == 0 and (TB == B or TB % tb_align == 0), (
            "block_b must divide B and be sublane-aligned (or equal B)")
    grid = (B // TB,)

    vmem_est = _vmem_estimate_bytes(TB, S_pad, H, key_bytes, out_bytes)
    vmem_limit = int(min(max(2 * vmem_est, 32 * 1024 * 1024),
                         56 * 1024 * 1024))

    # Advisory cost hint so XLA schedules the hoisted wq matmul and callers
    # correctly around the custom call.
    flops = (2 * B * S_pad * H * H                   # Ua matmul
             + 2 * (B // TB) * TB * TB * S_pad * H   # block-diag context matmul
             + 4 * B * S_pad * H)                    # score multiply + reduce
    cost = pl.CostEstimate(
        flops=int(flops),
        transcendentals=int(B * S_pad * H + B * S_pad),   # tanh + exp
        bytes_accessed=int(keys_flat.size * key_bytes + wq.size * 4
                           + ua_c.size * key_bytes + va2.size * 4
                           + B * H * out_bytes + B * S_pad * out_bytes))

    kernel = functools.partial(_bahdanau_kernel, block_b=TB, seq_len=S,
                               seq_pad=S_pad, tanh_dtype=tanh_dtype)

    # NOTE: keys spec left at default double-buffering; only sweep
    # pipeline_mode=pl.Buffered(3) if profiling shows latency-exposed DMA.
    ctx, w = pl.pallas_call(
        kernel,
        out_shape=(
            jax.ShapeDtypeStruct((B, H), out_dtype),
            jax.ShapeDtypeStruct((B, S_pad), out_dtype),
        ),
        grid_spec=pltpu.PrefetchScalarGridSpec(
            num_scalar_prefetch=0,
            grid=grid,
            in_specs=[
                pl.BlockSpec((TB, H), lambda i: (i, 0)),           # wq (+bias)
                pl.BlockSpec((TB * S_pad, H), lambda i: (i, 0)),   # keys flat
                pl.BlockSpec((H, H), lambda i: (0, 0)),            # Ua
                pl.BlockSpec((1, H), lambda i: (0, 0)),            # Va row
            ],
            out_specs=[
                pl.BlockSpec((TB, H), lambda i: (i, 0)),           # context
                pl.BlockSpec((TB, S_pad), lambda i: (i, 0)),       # weights
            ],
        ),
        compiler_params=pltpu.CompilerParams(
            dimension_semantics=("parallel",),
            vmem_limit_bytes=vmem_limit),
        cost_estimate=cost,
    )(wq, keys_flat, ua_c, va2)

    # Restore the module's (B, 1, H) / (B, 1, S) output shapes.
    ctx = ctx.reshape(B, 1, H)
    w = w[:, :S].reshape(B, 1, S)
    return ctx, w


def _reference(query, keys, wa, ba, ua, bu, va, bv):
    hp = lax.Precision.HIGHEST
    wq = jnp.einsum("bqh,hk->bqk", query, wa, precision=hp) + ba   # (B,1,H)
    uk = jnp.einsum("bsh,hk->bsk", keys, ua, precision=hp) + bu    # (B,S,H)
    scores = jnp.einsum("bsh,h->bs", jnp.tanh(wq + uk), va,
                        precision=hp)[..., None] + bv              # (B,S,1)
    scores = jnp.swapaxes(scores, 1, 2)                            # (B,1,S)
    weights = jax.nn.softmax(scores, axis=-1)
    context = jnp.einsum("bqs,bsh->bqh", weights, keys, precision=hp)
    return context, weights


if __name__ == "__main__":
    B, S, H = 2, 8, 32
    key = jax.random.PRNGKey(0)
    kq, kk, k1, k2, k3, k4, k5, k6 = jax.random.split(key, 8)

    query = jax.random.normal(kq, (B, 1, H), dtype=jnp.float32)
    keys = jax.random.normal(kk, (B, S, H), dtype=jnp.float32)

    # Deterministic parameter init (uniform, matching nn.Linear shapes).
    bound = 1.0 / (H ** 0.5)
    wa = jax.random.uniform(k1, (H, H), jnp.float32, -bound, bound)  # (in, out)
    ba = jax.random.uniform(k2, (H,), jnp.float32, -bound, bound)
    ua = jax.random.uniform(k3, (H, H), jnp.float32, -bound, bound)  # (in, out)
    bu = jax.random.uniform(k4, (H,), jnp.float32, -bound, bound)
    va = jax.random.uniform(k5, (H,), jnp.float32, -bound, bound)    # Va: H -> 1
    bv = jax.random.uniform(k6, (1,), jnp.float32, -bound, bound)

    ctx_ref, w_ref = _reference(query, keys, wa, ba, ua, bu, va, bv)

    # f32 path. Tolerance covers MXU-vs-XLA default matmul precision only;
    # softmax uses an exact reciprocal so weights sum to 1 tightly.
    ctx, w = bahdanau_attention(query, keys, wa, ba, ua, bu, va, bv)
    jax.block_until_ready((ctx, w))
    assert ctx.shape == (B, 1, H) and w.shape == (B, 1, S)
    assert jnp.allclose(ctx, ctx_ref, atol=2e-2, rtol=2e-2)
    assert jnp.allclose(w, w_ref, atol=2e-2, rtol=2e-2)
    assert jnp.allclose(jnp.sum(w, axis=-1), 1.0, atol=1e-4)

    # bf16 keys/Ua path (halves keys DMA traffic); looser tolerance for bf16
    # quantization of keys/Ua and of the context-matmul weights.
    ctx16, w16 = bahdanau_attention(query, keys, wa, ba, ua, bu, va, bv,
                                    compute_dtype=jnp.bfloat16)
    jax.block_until_ready((ctx16, w16))
    assert ctx16.shape == (B, 1, H) and w16.shape == (B, 1, S)
    assert jnp.allclose(ctx16, ctx_ref, atol=1e-1, rtol=1e-1)
    assert jnp.allclose(w16, w_ref, atol=1e-1, rtol=1e-1)

    print("KERNEL_OK")
</pallas_src>

<mosaic_0001>
module attributes {stable_mosaic.version = 11 : i64} {
  func.func @_bahdanau_kernel(%arg0: i32, %arg1: memref<2x32xf32, #tpu.memory_space<vmem>>, %arg2: memref<16x32xf32, #tpu.memory_space<vmem>>, %arg3: memref<32x32xf32, #tpu.memory_space<vmem>>, %arg4: memref<1x32xf32, #tpu.memory_space<vmem>>, %arg5: memref<2x32xf32, #tpu.memory_space<vmem>>, %arg6: memref<2x8xf32, #tpu.memory_space<vmem>>) attributes {dimension_semantics = [#tpu.dimension_semantics<parallel>], iteration_bounds = array<i64: 1>, scalar_prefetch = 0 : i64, scratch_operands = 0 : i64, tpu.core_type = #tpu.core_type<tc>, window_params = [{transform_indices = @transform_0, window_bounds = array<i64: 2, 32>}, {transform_indices = @transform_1, window_bounds = array<i64: 16, 32>}, {pipeline_mode = #tpu.pipeline_mode<synchronous>, transform_indices = @transform_2, window_bounds = array<i64: 32, 32>}, {pipeline_mode = #tpu.pipeline_mode<synchronous>, transform_indices = @transform_3, window_bounds = array<i64: 1, 32>}, {transform_indices = @transform_4, window_bounds = array<i64: 2, 32>}, {transform_indices = @transform_5, window_bounds = array<i64: 2, 8>}]} {
    %c0 = arith.constant 0 : index
    %c0_0 = arith.constant 0 : index
    %0 = vector.load %arg2[%c0, %c0_0] : memref<16x32xf32, #tpu.memory_space<vmem>>, vector<16x32xf32>
    %c0_1 = arith.constant 0 : index
    %c0_2 = arith.constant 0 : index
    %1 = vector.load %arg3[%c0_1, %c0_2] : memref<32x32xf32, #tpu.memory_space<vmem>>, vector<32x32xf32>
    %cst = arith.constant dense<0.000000e+00> : vector<16x32xf32>
    %2 = tpu.matmul %0, %1, %cst {dimension_numbers = #tpu.dot_dimension_numbers<[1], [0], [0], [1], [0, 0, 1, 1], [], []>} : vector<16x32xf32>, vector<32x32xf32>, vector<16x32xf32> -> vector<16x32xf32>
    %3 = vector.shape_cast %2 : vector<16x32xf32> to vector<2x8x32xf32>
    %c0_3 = arith.constant 0 : index
    %c0_4 = arith.constant 0 : index
    %4 = vector.load %arg1[%c0_3, %c0_4] : memref<2x32xf32, #tpu.memory_space<vmem>>, vector<2x32xf32>
    %5 = vector.shape_cast %4 : vector<2x32xf32> to vector<2x1x32xf32>
    %6 = vector.broadcast %5 : vector<2x1x32xf32> to vector<2x8x32xf32>
    %7 = arith.addf %3, %6 : vector<2x8x32xf32>
    %8 = math.tanh %7 : vector<2x8x32xf32>
    %c0_5 = arith.constant 0 : index
    %c0_6 = arith.constant 0 : index
    %9 = vector.load %arg4[%c0_5, %c0_6] : memref<1x32xf32, #tpu.memory_space<vmem>>, vector<1x32xf32>
    %10 = vector.shape_cast %9 : vector<1x32xf32> to vector<1x1x32xf32>
    %11 = vector.broadcast %10 : vector<1x1x32xf32> to vector<2x8x32xf32>
    %12 = arith.mulf %8, %11 : vector<2x8x32xf32>
    %cst_7 = arith.constant dense<0.000000e+00> : vector<2x8xf32>
    %13 = vector.multi_reduction <add>, %12, %cst_7 [2] : vector<2x8x32xf32> to vector<2x8xf32>
    %cst_8 = arith.constant dense<0xFF800000> : vector<2xf32>
    %14 = vector.multi_reduction <maximumf>, %13, %cst_8 [1] : vector<2x8xf32> to vector<2xf32>
    %15 = vector.shape_cast %14 : vector<2xf32> to vector<2x1xf32>
    %16 = vector.broadcast %15 : vector<2x1xf32> to vector<2x8xf32>
    %17 = arith.subf %13, %16 : vector<2x8xf32>
    %18 = math.exp %17 : vector<2x8xf32>
    %cst_9 = arith.constant dense<0.000000e+00> : vector<2xf32>
    %19 = vector.multi_reduction <add>, %18, %cst_9 [1] : vector<2x8xf32> to vector<2xf32>
    %20 = vector.shape_cast %19 : vector<2xf32> to vector<2x1xf32>
    %21 = vector.broadcast %20 : vector<2x1xf32> to vector<2x8xf32>
    %22 = arith.divf %18, %21 : vector<2x8xf32>
    %23 = tpu.concatenate %22, %22 in 1 : vector<2x8xf32>, vector<2x8xf32> -> vector<2x16xf32>
    %24 = tpu.iota {dimensions = array<i32: 1>} : vector<2x16xi32>
    %25 = tpu.iota {dimensions = array<i32: 0>} : vector<2x16xi32>
    %c8_i32 = arith.constant 8 : i32
    %26 = vector.broadcast %c8_i32 : i32 to vector<2x16xi32>
    %27 = arith.muli %25, %26 : vector<2x16xi32>
    %28 = arith.cmpi sge, %24, %27 : vector<2x16xi32>
    %c8_i32_10 = arith.constant 8 : i32
    %29 = vector.broadcast %c8_i32_10 : i32 to vector<2x16xi32>
    %30 = arith.addi %27, %29 : vector<2x16xi32>
    %31 = arith.cmpi slt, %24, %30 : vector<2x16xi32>
    %32 = arith.andi %28, %31 : vector<2x16xi1>
    %cst_11 = arith.constant 0.000000e+00 : f32
    %33 = vector.broadcast %cst_11 : f32 to vector<2x16xf32>
    %34 = arith.select %32, %23, %33 : vector<2x16xi1>, vector<2x16xf32>
    %cst_12 = arith.constant dense<0.000000e+00> : vector<2x32xf32>
    %35 = tpu.matmul %34, %0, %cst_12 {dimension_numbers = #tpu.dot_dimension_numbers<[1], [0], [0], [1], [0, 0, 1, 1], [], []>} : vector<2x16xf32>, vector<16x32xf32>, vector<2x32xf32> -> vector<2x32xf32>
    %c0_13 = arith.constant 0 : index
    %c0_14 = arith.constant 0 : index
    %36 = vector.load %arg5[%c0_13, %c0_14] : memref<2x32xf32, #tpu.memory_space<vmem>>, vector<2x32xf32>
    tpu.vector_store %arg5[%c0_13, %c0_14], %35 {strides = array<i32>} : memref<2x32xf32, #tpu.memory_space<vmem>>, vector<2x32xf32>,
    %c0_15 = arith.constant 0 : index
    %c0_16 = arith.constant 0 : index
    %37 = vector.load %arg6[%c0_15, %c0_16] : memref<2x8xf32, #tpu.memory_space<vmem>>, vector<2x8xf32>
    tpu.vector_store %arg6[%c0_15, %c0_16], %22 {strides = array<i32>} : memref<2x8xf32, #tpu.memory_space<vmem>>, vector<2x8xf32>,
    return
  }
  func.func @transform_0(%arg0: i32) -> (i32, i32) {
    %c0_i32 = arith.constant 0 : i32
    %c0_i32_0 = arith.constant 0 : i32
    return %arg0, %c0_i32 : i32, i32
  }
  func.func @transform_1(%arg0: i32) -> (i32, i32) {
    %c0_i32 = arith.constant 0 : i32
    %c0_i32_0 = arith.constant 0 : i32
    return %arg0, %c0_i32 : i32, i32
  }
  func.func @transform_2(%arg0: i32) -> (i32, i32) {
    %c0_i32 = arith.constant 0 : i32
    %c0_i32_0 = arith.constant 0 : i32
    %c0_i32_1 = arith.constant 0 : i32
    return %c0_i32, %c0_i32_0 : i32, i32
  }
  func.func @transform_3(%arg0: i32) -> (i32, i32) {
    %c0_i32 = arith.constant 0 : i32
    %c0_i32_0 = arith.constant 0 : i32
    %c0_i32_1 = arith.constant 0 : i32
    return %c0_i32, %c0_i32_0 : i32, i32
  }
  func.func @transform_4(%arg0: i32) -> (i32, i32) {
    %c0_i32 = arith.constant 0 : i32
    %c0_i32_0 = arith.constant 0 : i32
    return %arg0, %c0_i32 : i32, i32
  }
  func.func @transform_5(%arg0: i32) -> (i32, i32) {
    %c0_i32 = arith.constant 0 : i32
    %c0_i32_0 = arith.constant 0 : i32
    return %arg0, %c0_i32 : i32, i32
  }
}

</mosaic_0001>

<llo_original>
// kernel: tpu_custom_call.1
$region0: #{tpu_custom_call.1}
  #allocation0 [shape = 'u32[]', space=smem, size = 0x4, offset = 0x4, fixed_abs, tag = 'smem constant byte address 0x4 - core index']
  #allocation1 [shape = 'u32[144,128]{1,0:T(1,128)}', space=vmem, size = 0x12000, scoped, tag = 'internal scratch']
  %s0 = inlined_call_operand.hbm [shape: f32[2,32], index: 0, kind: input, shape index: {}]
  %s1 = inlined_call_operand.hbm [shape: f32[16,32], index: 1, kind: input, shape index: {}]
  %s2 = inlined_call_operand.hbm [shape: f32[32,32], index: 2, kind: input, shape index: {}]
  %s3 = inlined_call_operand.vmem [shape: f32[1,32], index: 3, kind: input, shape index: {}]
  %s4 = inlined_call_operand.hbm [shape: f32[2,32], index: 4, kind: output, shape index: {0}]
  %s5 = inlined_call_operand.hbm [shape: f32[2,8], index: 5, kind: output, shape index: {1}]
  %6 = xla_tuple %s4, %s5
  %s7 = sld [smem:[#allocation0]]
  $region46: #{tpu_custom_call.1} parent=0
    _
  %s9 = ssub.s32 1, %s7
  %s10 = scalar_select 0, %s9, %s7
  $region1: #{tpu_custom_call.1} parent=0
    #allocation2 [shape = 'u8[1024]{0}', space=vmem, size = 0x400, scoped, tag = 'input window, operand 0, single buffered']
    #allocation3 [shape = 's32[1]{0}', space=sflag, size = 0x4, scoped, tag = 'scoped memory for tpu_custom_call.1']
    #allocation4 [shape = 's32[1]{0}', space=sflag, size = 0x4, scoped, tag = 'scoped memory for tpu_custom_call.1']
    #allocation5 [shape = 'u8[8192]{0}', space=vmem, size = 0x2000, scoped, tag = 'input window, operand 1, single buffered']
    #allocation6 [shape = 's32[1]{0}', space=sflag, size = 0x4, scoped, tag = 'scoped memory for tpu_custom_call.1']
    #allocation7 [shape = 'u8[16384]{0}', space=vmem, size = 0x4000, scoped, tag = 'input window, operand 2, single buffered']
    #allocation8 [shape = 'u8[1024]{0}', space=vmem, size = 0x400, scoped, tag = 'output window, operand 0, single buffered']
    #allocation9 [shape = 'u8[1024]{0}', space=vmem, size = 0x400, scoped, tag = 'output window, operand 1, single buffered']
    #allocation10 [shape = 's32[1]{0}', space=sflag, size = 0x4, scoped, tag = 'scoped memory for tpu_custom_call.1']
    %11 = vsyncpa [#allocation3], 0
    %12 = vsyncpa [#allocation6], 0
    %13 = vsyncpa [#allocation4], 0
    %14 = vsyncpa [#allocation10], 0
    // Predicated region
    $region2: #{tpu_custom_call.1} parent=1 // pred_check
      _
    $region3: #{tpu_custom_call.1} parent=1 // pred_check_branch
      %16 = sbr.rel (0) target = $region5
    $region4: #{tpu_custom_call.1} parent=1 // pred_region
      %s18 = ssub.s32 32, 32
      %19 = vsyncadd [#allocation3], %s18
      %s21 = sshll.u32 [#allocation2], 4
      %s22 = int_to_ptr.vmem [resolvable:$true] %s21
      %24 = dma.hbm_to_vmem [thread:$0]  %s0, 32, %s22, [#allocation3]
    $region5: #{tpu_custom_call.1} parent=1 // pred_fallthru
      _
    // Predicated region
    $region6: #{tpu_custom_call.1} parent=1 // pred_check
      _
    $region7: #{tpu_custom_call.1} parent=1 // pred_check_branch
      %26 = sbr.rel (0) target = $region9
    $region8: #{tpu_custom_call.1} parent=1 // pred_region
      %s28 = ssub.s32 256, 256
      %29 = vsyncadd [#allocation6], %s28
      %s30 = sshll.u32 [#allocation5], 4
      %s31 = int_to_ptr.vmem [resolvable:$true] %s30
      %36 = dma.hbm_to_vmem [thread:$0]  %s1, 256, %s31, [#allocation6], 128, 128, 8
    $region9: #{tpu_custom_call.1} parent=1 // pred_fallthru
      _
    // Predicated region
    $region10: #{tpu_custom_call.1} parent=1 // pred_check
      _
    $region11: #{tpu_custom_call.1} parent=1 // pred_check_branch
      %38 = sbr.rel (0) target = $region13
    $region12: #{tpu_custom_call.1} parent=1 // pred_region
      %s40 = ssub.s32 512, 512
      %41 = vsyncadd [#allocation6], %s40
      %s42 = sshll.u32 [#allocation7], 4
      %s43 = int_to_ptr.vmem [resolvable:$true] %s42
      %48 = dma.hbm_to_vmem [thread:$0]  %s2, 512, %s43, [#allocation6], 128, 128, 8
    $region13: #{tpu_custom_call.1} parent=1 // pred_fallthru
      _
    // Predicated region
    $region14: #{tpu_custom_call.1} parent=1 // pred_check
      _
    $region15: #{tpu_custom_call.1} parent=1 // pred_check_branch
      %50 = sbr.rel (0) target = $region17
    $region16: #{tpu_custom_call.1} parent=1 // pred_region
      _
    $region17: #{tpu_custom_call.1} parent=1 // pred_fallthru
      _
    // Predicated region
    $region18: #{tpu_custom_call.1} parent=1 // pred_check
      _
    $region19: #{tpu_custom_call.1} parent=1 // pred_check_branch
      %52 = sbr.rel (0) target = $region21
    $region20: #{tpu_custom_call.1} parent=1 // pred_region
      %53 = dma.done [#allocation3], 32
    $region21: #{tpu_custom_call.1} parent=1 // pred_fallthru
      _
    // Predicated region
    $region22: #{tpu_custom_call.1} parent=1 // pred_check
      _
    $region23: #{tpu_custom_call.1} parent=1 // pred_check_branch
      %55 = sbr.rel (0) target = $region25
    $region24: #{tpu_custom_call.1} parent=1 // pred_region
      %56 = dma.done [#allocation6], 256
    $region25: #{tpu_custom_call.1} parent=1 // pred_fallthru
      _
    // Predicated region
    $region26: #{tpu_custom_call.1} parent=1 // pred_check
      _
    $region27: #{tpu_custom_call.1} parent=1 // pred_check_branch
      %58 = sbr.rel (0) target = $region29
    $region28: #{tpu_custom_call.1} parent=1 // pred_region
      %59 = dma.done [#allocation6], 512
    $region29: #{tpu_custom_call.1} parent=1 // pred_fallthru
      _
    %v60 = vld [vmem:[#allocation5] sm:$0xff]
    %v61 = vld [vmem:[#allocation5 + $0x8] sm:$0xff]
    %v62 = vld [vmem:[#allocation7] sm:$0xff]
    %v63 = vld [vmem:[#allocation7 + $0x8] sm:$0xff]
    %v64 = vld [vmem:[#allocation7 + $0x10] sm:$0xff]
    %v65 = vld [vmem:[#allocation7 + $0x18] sm:$0xff]
    %vm66 = vcmask 261120
    %v68 = vsel %vm66, %v60, 0
    %v71 = vsel %vm66, %v61, 0
    %73 = vmatprep.subr.mxu0 0.0
    %74 = vmatpush1.msra.mxu0 0.0
    %75 = vmatprep.subr.mxu0 0.0
    %76 = vmatpush1.msra.mxu0 0.0
    %77 = vmatprep.subr.mxu0 0.0
    %78 = vmatpush1.msra.mxu0 0.0
    %79 = vmatprep.subr.mxu0 0.0
    %80 = vmatpush1.msra.mxu0 0.0
    %81 = vmatprep.subr.mxu0 0.0
    %82 = vmatpush1.msra.mxu0 0.0
    %83 = vmatprep.subr.mxu0 0.0
    %84 = vmatpush1.msra.mxu0 0.0
    %85 = vmatprep.subr.mxu0 0.0
    %86 = vmatpush1.msra.mxu0 0.0
    %87 = vmatprep.subr.mxu0 0.0
    %88 = vmatpush1.msra.mxu0 0.0
    %89 = vmatprep.subr.mxu0 0.0
    %90 = vmatpush1.msra.mxu0 0.0
    %91 = vmatprep.subr.mxu0 0.0
    %92 = vmatpush1.msra.mxu0 0.0
    %93 = vmatprep.subr.mxu0 0.0
    %94 = vmatpush1.msra.mxu0 0.0
    %95 = vmatprep.subr.mxu0 0.0
    %96 = vmatpush1.msra.mxu0 0.0
    %97 = vmatprep.subr.mxu0 0.0
    %98 = vmatpush1.msra.mxu0 %v65
    %99 = vmatprep.subr.mxu0 0.0
    %100 = vmatpush1.msra.mxu0 %v64
    %101 = vmatprep.subr.mxu0 0.0
    %102 = vmatpush1.msra.mxu0 %v63
    %103 = vmatprep.subr.mxu0 0.0
    %104 = vmatpush1.msra.mxu0 %v62
    %105 = vmatprep.subr.mxu0 0.0
    %106 = vmatpush2.msra.mxu0 0.0
    %107 = vmatprep.subr.mxu0 0.0
    %108 = vmatpush2.msra.mxu0 0.0
    %109 = vmatprep.subr.mxu0 0.0
    %110 = vmatpush2.msra.mxu0 0.0
    %111 = vmatprep.subr.mxu0 0.0
    %112 = vmatpush2.msra.mxu0 0.0
    %113 = vmatprep.subr.mxu0 0.0
    %114 = vmatpush2.msra.mxu0 0.0
    %115 = vmatprep.subr.mxu0 0.0
    %116 = vmatpush2.msra.mxu0 0.0
    %117 = vmatprep.subr.mxu0 0.0
    %118 = vmatpush2.msra.mxu0 0.0
    %119 = vmatprep.subr.mxu0 0.0
    %120 = vmatpush2.msra.mxu0 0.0
    %121 = vmatprep.subr.mxu0 0.0
    %122 = vmatpush2.msra.mxu0 0.0
    %123 = vmatprep.subr.mxu0 0.0
    %124 = vmatpush2.msra.mxu0 0.0
    %125 = vmatprep.subr.mxu0 0.0
    %126 = vmatpush2.msra.mxu0 0.0
    %127 = vmatprep.subr.mxu0 0.0
    %128 = vmatpush2.msra.mxu0 0.0
    %129 = vmatprep.subr.mxu0 0.0
    %130 = vmatpush2.msra.mxu0 0.0
    %131 = vmatprep.subr.mxu0 0.0
    %132 = vmatpush2.msra.mxu0 0.0
    %133 = vmatprep.subr.mxu0 0.0
    %134 = vmatpush2.msra.mxu0 0.0
    %135 = vmatprep.subr.mxu0 0.0
    %136 = vmatpush2.msra.mxu0 0.0
    %137 = vmatprep.mubr.f32.mxu0 0.0
    %138 = vmatmul.mubr.f32.gmra.mxu0 %v68
    %v139 = vpop.f32.mrf.mxu0
    %v140 = vadd.f32 0.0, %v139
    %v141 = vpop.f32.mrf.mxu0
    %142 = vmatprep.mubr.f32.mxu0 0.0
    %143 = vmatmul.mubr.f32.gmra.mxu0 %v71
    %v144 = vpop.f32.mrf.mxu0
    %v145 = vadd.f32 0.0, %v144
    %v146 = vpop.f32.mrf.mxu0
    %147 = vdwg.mxu0
    %v148 = vld [vmem:[#allocation2] sm:$0x3]
    %v151 = vunpack.c.l.s4 1966171168
    %v152 = vunpack.c.0.s8 %v151
    %v153 = vlaneseq
    %v154 = vshrl.u32 %v153, 7
    %v155 = vsub.s32 %v152, %v154
    %v156 = vrot.slane %v148, %v155
    %v157 = vcombine.high %v156, %v156
    %v159 = vunpack.c.l.s4 1966171168
    %v160 = vunpack.c.0.s8 %v159
    %v161 = vlaneseq
    %v162 = vshrl.u32 %v161, 7
    %v163 = vsub.s32 %v160, %v162
    %v164 = vrot.slane %v156, %v163
    %v166 = vunpack.c.l.s4 1966171168
    %v167 = vunpack.c.0.s8 %v166
    %v168 = vlaneseq
    %v169 = vshrl.u32 %v168, 7
    %v170 = vsub.s32 %v167, %v169
    %v171 = vrot.slane %v157, %v170
    %v172 = vlaneseq
    %v173 = vshrl.u32 %v172, 7
    %v174 = vsub.s32 0, %v173
    %v175 = vrot.slane %v164, %v174
    %v176 = vlaneseq
    %v177 = vshrl.u32 %v176, 7
    %v178 = vsub.s32 0, %v177
    %v179 = vrot.slane %v171, %v178
    %v182 = vadd.f32 %v140, %v175
    %v183 = vadd.f32 %v145, %v179
    %v184 = vtanh.pop %v182
    %v185 = vtanh.pop %v183
    %v186 = vld [vmem:[%s3] sm:$0x1]
    %v188 = vlaneseq
    %v189 = vshrl.u32 %v188, 7
    %v190 = vsub.s32 0, %v189
    %v191 = vrot.slane %v186, %v190
    %v193 = vmul.f32 %v184, %v191
    %v194 = vmul.f32 %v185, %v191
    %v195 = vsel %vm66, %v193, 0.0
    %196 = vadd.xlane.f32.xlu0 %v195
    %v197 = vpop.xlane.xlu0 %196
    %v198 = vsel %vm66, %v194, 0.0
    %199 = vadd.xlane.f32.xlu0 %v198
    %v200 = vpop.xlane.xlu0 %199
    %v203 = vlaneseq
    %v204 = vand.u32 %v203, 127
    %v205 = vlaneseq
    %v206 = vshrl.u32 %v205, 7
    %v207 = vsub.s32 %v204, %v206
    %v208 = vrot.slane %v197, %v207
    %v209 = vlaneseq
    %v210 = vshrl.u32 %v209, 7
    %v211 = vsub.s32 %v204, %v210
    %v212 = vrot.slane %v200, %v211
    %vm213 = vcmask 1041409
    %v214 = vsel %vm213, %v212, %v208
    %vm216 = vcmask 58368
    %v217 = vsel %vm216, %v214, -inf
    %218 = vmax.xlane.f32.xlu0 %v217
    %v219 = vpop.xlane.xlu0 %218
    %v221 = vlaneseq
    %v222 = vshrl.u32 %v221, 7
    %v223 = vsub.s32 0, %v222
    %v224 = vrot.slane %v219, %v223
    %v225 = vlaneseq
    %v226 = vshrl.u32 %v225, 7
    %v227 = vsub.s32 1, %v226
    %v228 = vrot.slane %v219, %v227
    %v231 = vsub.f32 %v197, %v224
    %v232 = vsub.f32 %v200, %v228
    %v233 = vmul.f32 %v231, 1.442695
    %v234 = vpow.pop %v233
    %v235 = vmul.f32 %v232, 1.442695
    %v236 = vpow.pop %v235
    %239 = vset.pattern.permute.xlu0 0
    %240 = vperm.xlu0 %239, %v234
    %v241 = vpop.permute.xlu0 %240
    %242 = vset.pattern.permute.xlu0 0
    %243 = vperm.xlu0 %242, %v236
    %v244 = vpop.permute.xlu0 %243
    %v245 = vlaneseq
    %v246 = vshrl.u32 %v245, 7
    %v247 = vsub.s32 %v204, %v246
    %v248 = vrot.slane %v241, %v247
    %v249 = vlaneseq
    %v250 = vshrl.u32 %v249, 7
    %v251 = vsub.s32 %v204, %v250
    %v252 = vrot.slane %v244, %v251
    %v253 = vsel %vm213, %v252, %v248
    %v255 = vsel %vm216, %v253, 0.0
    %256 = vadd.xlane.f32.xlu0 %v255
    %v257 = vpop.xlane.xlu0 %256
    %v259 = vlaneseq
    %v260 = vshrl.u32 %v259, 7
    %v261 = vsub.s32 0, %v260
    %v262 = vrot.slane %v257, %v261
    %v263 = vlaneseq
    %v264 = vshrl.u32 %v263, 7
    %v265 = vsub.s32 1, %v264
    %v266 = vrot.slane %v257, %v265
    %v269 = vrcp.pop %v262
    %v270 = vmul.f32 %v234, %v269
    %v271 = vrcp.pop %v266
    %v272 = vmul.f32 %v236, %v271
    %275 = vset.pattern.permute.xlu0 0
    %276 = vperm.xlu0 %275, %v270
    %v277 = vpop.permute.xlu0 %276
    %278 = vset.pattern.permute.xlu0 0
    %279 = vperm.xlu0 %278, %v272
    %v280 = vpop.permute.xlu0 %279
    %v281 = vlaneseq
    %v282 = vshrl.u32 %v281, 7
    %v283 = vsub.s32 %v204, %v282
    %v284 = vrot.slane %v277, %v283
    %v285 = vlaneseq
    %v286 = vshrl.u32 %v285, 7
    %v287 = vsub.s32 %v204, %v286
    %v288 = vrot.slane %v280, %v287
    %v289 = vsel %vm213, %v288, %v284
    %v291 = vadd.s32 %v204, 4294967288
    %v292 = vlaneseq
    %v293 = vshrl.u32 %v292, 7
    %v294 = vsub.s32 %v291, %v293
    %v295 = vrot.slane %v277, %v294
    %v296 = vlaneseq
    %v297 = vshrl.u32 %v296, 7
    %v298 = vsub.s32 %v291, %v297
    %v299 = vrot.slane %v280, %v298
    %v300 = vsel %vm213, %v299, %v295
    %vm302 = vcmask 64512
    %v303 = vsel %vm302, %v289, %v300
    %v304 = vlaneseq
    %v305 = vshrl.u32 %v304, 7
    %v306 = vmul.u32 %v305, 8
    %vm307 = vcmp.ge.s32.totalorder %v204, %v306
    %v308 = vadd.s32 %v306, 8
    %vm309 = vcmp.lt.s32.totalorder %v204, %v308
    %vm310 = vmand %vm307, %vm309
    %v311 = vsel %vm310, %v303, 0.0
    %vm312 = vcmask 130048
    %v314 = vsel %vm312, %v311, 0
    %316 = vmatprep.subr.mxu0 0.0
    %317 = vmatpush1.msra.mxu0 0.0
    %318 = vmatprep.subr.mxu0 0.0
    %319 = vmatpush1.msra.mxu0 0.0
    %320 = vmatprep.subr.mxu0 0.0
    %321 = vmatpush1.msra.mxu0 0.0
    %322 = vmatprep.subr.mxu0 0.0
    %323 = vmatpush1.msra.mxu0 0.0
    %324 = vmatprep.subr.mxu0 0.0
    %325 = vmatpush1.msra.mxu0 0.0
    %326 = vmatprep.subr.mxu0 0.0
    %327 = vmatpush1.msra.mxu0 0.0
    %328 = vmatprep.subr.mxu0 0.0
    %329 = vmatpush1.msra.mxu0 0.0
    %330 = vmatprep.subr.mxu0 0.0
    %331 = vmatpush1.msra.mxu0 0.0
    %332 = vmatprep.subr.mxu0 0.0
    %333 = vmatpush1.msra.mxu0 0.0
    %334 = vmatprep.subr.mxu0 0.0
    %335 = vmatpush1.msra.mxu0 0.0
    %336 = vmatprep.subr.mxu0 0.0
    %337 = vmatpush1.msra.mxu0 0.0
    %338 = vmatprep.subr.mxu0 0.0
    %339 = vmatpush1.msra.mxu0 0.0
    %340 = vmatprep.subr.mxu0 0.0
    %341 = vmatpush1.msra.mxu0 0.0
    %342 = vmatprep.subr.mxu0 0.0
    %343 = vmatpush1.msra.mxu0 0.0
    %344 = vmatprep.subr.mxu0 0.0
    %345 = vmatpush1.msra.mxu0 %v61
    %346 = vmatprep.subr.mxu0 0.0
    %347 = vmatpush1.msra.mxu0 %v60
    %348 = vmatprep.subr.mxu0 0.0
    %349 = vmatpush2.msra.mxu0 0.0
    %350 = vmatprep.subr.mxu0 0.0
    %351 = vmatpush2.msra.mxu0 0.0
    %352 = vmatprep.subr.mxu0 0.0
    %353 = vmatpush2.msra.mxu0 0.0
    %354 = vmatprep.subr.mxu0 0.0
    %355 = vmatpush2.msra.mxu0 0.0
    %356 = vmatprep.subr.mxu0 0.0
    %357 = vmatpush2.msra.mxu0 0.0
    %358 = vmatprep.subr.mxu0 0.0
    %359 = vmatpush2.msra.mxu0 0.0
    %360 = vmatprep.subr.mxu0 0.0
    %361 = vmatpush2.msra.mxu0 0.0
    %362 = vmatprep.subr.mxu0 0.0
    %363 = vmatpush2.msra.mxu0 0.0
    %364 = vmatprep.subr.mxu0 0.0
    %365 = vmatpush2.msra.mxu0 0.0
    %366 = vmatprep.subr.mxu0 0.0
    %367 = vmatpush2.msra.mxu0 0.0
    %368 = vmatprep.subr.mxu0 0.0
    %369 = vmatpush2.msra.mxu0 0.0
    %370 = vmatprep.subr.mxu0 0.0
    %371 = vmatpush2.msra.mxu0 0.0
    %372 = vmatprep.subr.mxu0 0.0
    %373 = vmatpush2.msra.mxu0 0.0
    %374 = vmatprep.subr.mxu0 0.0
    %375 = vmatpush2.msra.mxu0 0.0
    %376 = vmatprep.subr.mxu0 0.0
    %377 = vmatpush2.msra.mxu0 0.0
    %378 = vmatprep.subr.mxu0 0.0
    %379 = vmatpush2.msra.mxu0 0.0
    %380 = vmatprep.mubr.f32.mxu0 0.0
    %381 = vmatmul.mubr.f32.gmra.mxu0 %v314
    %v382 = vpop.f32.mrf.mxu0
    %v383 = vadd.f32 0.0, %v382
    %v384 = vpop.f32.mrf.mxu0
    %385 = vdwg.mxu0
    %vm386 = vcmask 254976
    %387 = vst.msk [vmem:[#allocation8] sm:$0x3] %vm386, %v383
    %388 = vst.msk [vmem:[#allocation9] sm:$0x3] %vm216, %v289
    // Predicated region
    $region30: #{tpu_custom_call.1} parent=1 // pred_check
      _
    $region31: #{tpu_custom_call.1} parent=1 // pred_check_branch
      %390 = sbr.rel (0) target = $region33
    $region32: #{tpu_custom_call.1} parent=1 // pred_region
      %s392 = ssub.s32 32, 32
      %393 = vsyncadd [#allocation4], %s392
      %s395 = sshll.u32 [#allocation8], 4
      %s396 = int_to_ptr.vmem [resolvable:$true] %s395
      %398 = dma.vmem_to_hbm [thread:$0]  %s396, 32, %s4, [#allocation4]
    $region33: #{tpu_custom_call.1} parent=1 // pred_fallthru
      _
    // Predicated region
    $region34: #{tpu_custom_call.1} parent=1 // pred_check
      _
    $region35: #{tpu_custom_call.1} parent=1 // pred_check_branch
      %400 = sbr.rel (0) target = $region37
    $region36: #{tpu_custom_call.1} parent=1 // pred_region
      %s402 = ssub.s32 32, 32
      %403 = vsyncadd [#allocation10], %s402
      %s405 = sshll.u32 [#allocation9], 4
      %s406 = int_to_ptr.vmem [resolvable:$true] %s405
      %408 = dma.vmem_to_hbm [thread:$0]  %s406, 32, %s5, [#allocation10]
    $region37: #{tpu_custom_call.1} parent=1 // pred_fallthru
      _
    // Predicated region
    $region38: #{tpu_custom_call.1} parent=1 // pred_check
      _
    $region39: #{tpu_custom_call.1} parent=1 // pred_check_branch
      %410 = sbr.rel (0) target = $region41
    $region40: #{tpu_custom_call.1} parent=1 // pred_region
      %411 = dma.done [#allocation4], 32
    $region41: #{tpu_custom_call.1} parent=1 // pred_fallthru
      _
    // Predicated region
    $region42: #{tpu_custom_call.1} parent=1 // pred_check
      _
    $region43: #{tpu_custom_call.1} parent=1 // pred_check_branch
      %413 = sbr.rel (0) target = $region45
    $region44: #{tpu_custom_call.1} parent=1 // pred_region
      %414 = dma.done [#allocation10], 32
    $region45: #{tpu_custom_call.1} parent=1 // pred_fallthru
      _
    %415 = vsyncpa [#allocation3], 1
    %416 = vsyncpa [#allocation6], 1
    %417 = vsyncpa [#allocation4], 1
    %418 = vsyncpa [#allocation10], 1

</llo_original>
